<compile_context>
chip_gen: v5e
topology: v5e:2x2
jax: 0.10.0
libtpu: 0.0.40
codegen_flags: <defaults>
</compile_context>

<pallas_src>
import math

import jax
import jax.numpy as jnp
from jax import lax
from jax.experimental import pallas as pl
from jax.experimental.pallas import tpu as pltpu


def _round_up(x: int, m: int) -> int:
    return ((x + m - 1) // m) * m


def _pick_k_tile(k_aligned: int, cap: int):
    """k_aligned: 128-multiple > cap.  Return (tk, k_pad): tk % 128 == 0,
    cap//2 <= tk <= cap, tk divides k_pad, k_pad >= k_aligned with minimal extra pad."""
    cap = max(128, (cap // 128) * 128)
    lo = max(128, (cap // 2 // 128) * 128)
    for t in range(cap, lo - 1, -128):
        if k_aligned % t == 0:
            return t, k_aligned                      # exact divisor: no extra pad
    best_t, best_pad = cap, _round_up(k_aligned, cap)
    for t in range(cap, lo - 1, -128):
        p = _round_up(k_aligned, t)
        if p < best_pad:
            best_t, best_pad = t, p
    return best_t, best_pad


def _make_kernel(*, has_bias: bool, use_scratch: bool, precision=None):
    """Build the kernel body for the given operand layout.

    Refs (in order): x (tm, tk), weight (tn, tk), [bias (1, tn)], out (tm, tn),
    [acc scratch (tm, tn) f32 — only when the output dtype is not f32].
    """

    def kernel(*refs):
        if has_bias:
            x_ref, w_ref, b_ref, o_ref = refs[0], refs[1], refs[2], refs[3]
            acc_ref = refs[4] if use_scratch else o_ref
        else:
            x_ref, w_ref, o_ref = refs[0], refs[1], refs[2]
            b_ref = None
            acc_ref = refs[3] if use_scratch else o_ref

        k = pl.program_id(2)

        @pl.when(k == 0)
        def _init():
            if has_bias and not use_scratch:
                # f32 output: seed the resident output block with the bias.
                acc_ref[...] = jnp.broadcast_to(
                    b_ref[...].astype(jnp.float32), acc_ref.shape
                )
            else:
                acc_ref[...] = jnp.zeros_like(acc_ref)

        # x:(tm,tk) . W:(tn,tk) contracting both last (K) dims -> (tm, tn).
        acc_ref[...] += lax.dot_general(
            x_ref[...],
            w_ref[...],
            dimension_numbers=(((1,), (1,)), ((), ())),
            preferred_element_type=jnp.float32,
            precision=precision,
        )

        if use_scratch:
            @pl.when(k == pl.num_programs(2) - 1)
            def _finalize():
                res = acc_ref[...]
                if has_bias:
                    res = res + b_ref[...].astype(jnp.float32)
                o_ref[...] = res.astype(o_ref.dtype)

    return kernel


def maml_linear_forward(
    x,
    weight,
    bias=None,
    *,
    tm_max: int = 512,
    tn_max: int = 512,
    tk_max: int = 1024,
    precision=None,
):
    """Pallas implementation of F.linear(x, weight, bias).

    x: (B, in_features); weight: (out_features, in_features) [PyTorch layout, used
    as-is — no transpose is materialized]; bias: (out_features,) or None.
    Returns (B, out_features) in x.dtype.
    """
    B, in_f = x.shape
    out_f, in_f_w = weight.shape
    assert in_f == in_f_w
    out_dtype = x.dtype
    has_bias = bias is not None

    # ---- K (contraction): the only axis that ever needs zero padding. ----
    if in_f <= tk_max:
        tk, k_pad = in_f, in_f               # full-dim block -> no alignment needed
    else:
        tk, k_pad = _pick_k_tile(_round_up(in_f, 128), tk_max)
    grid_k = k_pad // tk

    if k_pad != in_f:
        xk = jnp.pad(x, ((0, 0), (0, k_pad - in_f)))
        wk = jnp.pad(weight, ((0, 0), (0, k_pad - in_f)))
    else:
        xk, wk = x, weight

    # ---- M / N: no padding; cdiv grid, tail blocks are masked on store. ----
    tm = B if B <= tm_max else tm_max        # tm_max is a multiple of 8
    tn = out_f if out_f <= tn_max else tn_max  # tn_max is a multiple of 128
    grid_m = pl.cdiv(B, tm)
    grid_n = pl.cdiv(out_f, tn)

    # Megacore (v7x has 2 TensorCores): make sure a "parallel" axis has >= 2 steps.
    if grid_m * grid_n == 1:
        if B >= 16:
            tm = _round_up((B + 1) // 2, 8)
            grid_m = pl.cdiv(B, tm)
        elif out_f >= 256:
            tn = _round_up((out_f + 1) // 2, 128)
            grid_n = pl.cdiv(out_f, tn)

    accumulate_in_out = jnp.dtype(out_dtype) == jnp.float32
    kernel = _make_kernel(
        has_bias=has_bias, use_scratch=not accumulate_in_out, precision=precision
    )

    in_specs = [
        pl.BlockSpec((tm, tk), lambda i, j, k: (i, k)),   # x tile
        pl.BlockSpec((tn, tk), lambda i, j, k: (j, k)),   # weight tile (no transpose)
    ]
    operands = [xk, wk]
    if has_bias:
        in_specs.append(pl.BlockSpec((1, tn), lambda i, j, k: (0, j)))
        operands.append(bias.reshape(1, out_f))

    scratch_shapes = [] if accumulate_in_out else [pltpu.VMEM((tm, tn), jnp.float32)]

    itemsize = jnp.dtype(x.dtype).itemsize
    bytes_accessed = (
        B * k_pad * grid_n            # x is re-read once per N block
        + out_f * k_pad * grid_m      # W is re-read once per M block
        + B * out_f                   # output written once
        + (out_f if has_bias else 0)
    ) * itemsize

    out = pl.pallas_call(
        kernel,
        out_shape=jax.ShapeDtypeStruct((B, out_f), out_dtype),
        grid_spec=pltpu.PrefetchScalarGridSpec(
            num_scalar_prefetch=0,
            grid=(grid_m, grid_n, grid_k),
            in_specs=in_specs,
            out_specs=pl.BlockSpec((tm, tn), lambda i, j, k: (i, j)),
            scratch_shapes=scratch_shapes,
        ),
        compiler_params=pltpu.CompilerParams(
            dimension_semantics=("parallel", "parallel", "arbitrary"),
            vmem_limit_bytes=48 * 1024 * 1024,
        ),
        cost_estimate=pl.CostEstimate(
            flops=2 * B * out_f * k_pad,
            transcendentals=0,
            bytes_accessed=bytes_accessed,
        ),
    )(*operands)

    return out


def init_maml_linear_params(key, in_features, out_features, dtype=jnp.float32):
    """Deterministic init matching nn.init.kaiming_uniform_(a=sqrt(5)) + bias uniform."""
    kw, kb = jax.random.split(key)
    bound = 1.0 / math.sqrt(in_features)   # kaiming_uniform with a=sqrt(5) -> 1/sqrt(fan_in)
    weight = jax.random.uniform(
        kw, (out_features, in_features), dtype=dtype, minval=-bound, maxval=bound
    )
    bias = jax.random.uniform(
        kb, (out_features,), dtype=dtype, minval=-bound, maxval=bound
    )
    return weight, bias


# TODO(synk): clone_parameters / update_parameters / forward_with_params of MAMLLayer are
# host-side pytree bookkeeping (param - lr * grad, dict lookups); plain JAX, no kernel needed.

if __name__ == "__main__":
    key = jax.random.PRNGKey(0)
    k_x, k_p, k_x2, k_p2 = jax.random.split(key, 4)

    # --- small demo shapes matching the module's typical use (single-block path) ---
    batch, in_features, out_features = 8, 32, 16
    x = jax.random.normal(k_x, (batch, in_features), dtype=jnp.float32)
    weight, bias = init_maml_linear_params(k_p, in_features, out_features)

    y = jax.block_until_ready(maml_linear_forward(x, weight, bias))
    y_ref = x @ weight.T + bias
    assert y.shape == (batch, out_features)
    assert jnp.allclose(y, y_ref, atol=2e-2, rtol=2e-2)

    # --- bias=None path (bias operand skipped entirely) ---
    y_nb = jax.block_until_ready(maml_linear_forward(x, weight, None))
    assert jnp.allclose(y_nb, x @ weight.T, atol=2e-2, rtol=2e-2)

    # --- ragged shapes: cdiv grid tails, K tiling with exact zero pad, megacore M split ---
    b2, in2, out2 = 300, 700, 300
    x2 = jax.random.normal(k_x2, (b2, in2), dtype=jnp.float32)
    w2, bi2 = init_maml_linear_params(k_p2, in2, out2)

    y2 = jax.block_until_ready(maml_linear_forward(x2, w2, bi2, tk_max=256))
    y2_ref = x2 @ w2.T + bi2
    assert y2.shape == (b2, out2)
    assert jnp.allclose(y2, y2_ref, atol=2e-2, rtol=2e-2)

    print("KERNEL_OK")
</pallas_src>

<mosaic_0001>
module attributes {stable_mosaic.version = 11 : i64} {
  func.func @kernel(%arg0: i32, %arg1: i32, %arg2: i32, %arg3: memref<8x32xf32, #tpu.memory_space<vmem>>, %arg4: memref<16x32xf32, #tpu.memory_space<vmem>>, %arg5: memref<1x16xf32, #tpu.memory_space<vmem>>, %arg6: memref<8x16xf32, #tpu.memory_space<vmem>>) attributes {dimension_semantics = [#tpu.dimension_semantics<parallel>, #tpu.dimension_semantics<parallel>, #tpu.dimension_semantics<arbitrary>], iteration_bounds = array<i64: 1, 1, 1>, scalar_prefetch = 0 : i64, scratch_operands = 0 : i64, tpu.core_type = #tpu.core_type<tc>, window_params = [{transform_indices = @transform_0, window_bounds = array<i64: 8, 32>}, {transform_indices = @transform_1, window_bounds = array<i64: 16, 32>}, {transform_indices = @transform_2, window_bounds = array<i64: 1, 16>}, {transform_indices = @transform_3, window_bounds = array<i64: 8, 16>}]} {
    %c0_i32 = arith.constant 0 : i32
    %0 = arith.cmpi eq, %arg2, %c0_i32 : i32
    %1 = arith.extui %0 : i1 to i32
    %c0_i32_0 = arith.constant 0 : i32
    %2 = arith.cmpi ne, %1, %c0_i32_0 : i32
    scf.if %2 {
      %c0_8 = arith.constant 0 : index
      %c0_9 = arith.constant 0 : index
      %9 = vector.load %arg5[%c0_8, %c0_9] : memref<1x16xf32, #tpu.memory_space<vmem>>, vector<1x16xf32>
      %10 = vector.shape_cast %9 : vector<1x16xf32> to vector<1x16xf32>
      %11 = vector.broadcast %10 : vector<1x16xf32> to vector<8x16xf32>
      %c0_10 = arith.constant 0 : index
      %c0_11 = arith.constant 0 : index
      %12 = vector.load %arg6[%c0_10, %c0_11] : memref<8x16xf32, #tpu.memory_space<vmem>>, vector<8x16xf32>
      tpu.vector_store %arg6[%c0_10, %c0_11], %11 {strides = array<i32>} : memref<8x16xf32, #tpu.memory_space<vmem>>, vector<8x16xf32>,
    } else {
    }
    %c0 = arith.constant 0 : index
    %c0_1 = arith.constant 0 : index
    %3 = vector.load %arg6[%c0, %c0_1] : memref<8x16xf32, #tpu.memory_space<vmem>>, vector<8x16xf32>
    %c0_2 = arith.constant 0 : index
    %c0_3 = arith.constant 0 : index
    %4 = vector.load %arg3[%c0_2, %c0_3] : memref<8x32xf32, #tpu.memory_space<vmem>>, vector<8x32xf32>
    %c0_4 = arith.constant 0 : index
    %c0_5 = arith.constant 0 : index
    %5 = vector.load %arg4[%c0_4, %c0_5] : memref<16x32xf32, #tpu.memory_space<vmem>>, vector<16x32xf32>
    %cst = arith.constant dense<0.000000e+00> : vector<8x16xf32>
    %6 = tpu.matmul %4, %5, %cst {dimension_numbers = #tpu.dot_dimension_numbers<[1], [1], [0], [0], [0, 0, 1, 0], [], []>} : vector<8x32xf32>, vector<16x32xf32>, vector<8x16xf32> -> vector<8x16xf32>
    %7 = arith.addf %3, %6 : vector<8x16xf32>
    %c0_6 = arith.constant 0 : index
    %c0_7 = arith.constant 0 : index
    %8 = vector.load %arg6[%c0_6, %c0_7] : memref<8x16xf32, #tpu.memory_space<vmem>>, vector<8x16xf32>
    tpu.vector_store %arg6[%c0_6, %c0_7], %7 {strides = array<i32>} : memref<8x16xf32, #tpu.memory_space<vmem>>, vector<8x16xf32>,
    return
  }
  func.func @transform_0(%arg0: i32, %arg1: i32, %arg2: i32) -> (i32, i32) {
    %c0_i32 = arith.constant 0 : i32
    return %arg0, %arg2 : i32, i32
  }
  func.func @transform_1(%arg0: i32, %arg1: i32, %arg2: i32) -> (i32, i32) {
    %c0_i32 = arith.constant 0 : i32
    return %arg1, %arg2 : i32, i32
  }
  func.func @transform_2(%arg0: i32, %arg1: i32, %arg2: i32) -> (i32, i32) {
    %c0_i32 = arith.constant 0 : i32
    %c0_i32_0 = arith.constant 0 : i32
    return %c0_i32, %arg1 : i32, i32
  }
  func.func @transform_3(%arg0: i32, %arg1: i32, %arg2: i32) -> (i32, i32) {
    %c0_i32 = arith.constant 0 : i32
    return %arg0, %arg1 : i32, i32
  }
}

</mosaic_0001>

<llo_original>
// kernel: tpu_custom_call.1
$region0: #{tpu_custom_call.1}
  #allocation0 [shape = 'u32[]', space=smem, size = 0x4, offset = 0x4, fixed_abs, tag = 'smem constant byte address 0x4 - core index']
  #allocation1 [shape = 'u32[72,128]{1,0:T(1,128)}', space=vmem, size = 0x9000, scoped, tag = 'internal scratch']
  %s0 = inlined_call_operand.hbm [shape: f32[8,32], index: 0, kind: input, shape index: {}]
  %s1 = inlined_call_operand.hbm [shape: f32[16,32], index: 1, kind: input, shape index: {}]
  %s2 = inlined_call_operand.vmem [shape: f32[1,16], index: 2, kind: input, shape index: {}]
  %s3 = inlined_call_operand.hbm [shape: f32[8,16], index: 3, kind: output, shape index: {}]
  %s4 = sld [smem:[#allocation0]]
  $region34: #{tpu_custom_call.1} parent=0
    _
  %s6 = ssub.s32 1, %s4
  %s7 = scalar_select 0, %s6, %s4
  $region1: #{tpu_custom_call.1} parent=0
    #allocation2 [shape = 'u8[4096]{0}', space=vmem, size = 0x1000, scoped, tag = 'input window, operand 0, single buffered']
    #allocation3 [shape = 's32[1]{0}', space=sflag, size = 0x4, scoped, tag = 'scoped memory for tpu_custom_call.1']
    #allocation4 [shape = 's32[1]{0}', space=sflag, size = 0x4, scoped, tag = 'scoped memory for tpu_custom_call.1']
    #allocation5 [shape = 'u8[8192]{0}', space=vmem, size = 0x2000, scoped, tag = 'input window, operand 1, single buffered']
    #allocation6 [shape = 's32[1]{0}', space=sflag, size = 0x4, scoped, tag = 'scoped memory for tpu_custom_call.1']
    #allocation7 [shape = 'u8[4096]{0}', space=vmem, size = 0x1000, scoped, tag = 'output window, operand 0, single buffered']
    %8 = vsyncpa [#allocation3], 0
    %9 = vsyncpa [#allocation6], 0
    %10 = vsyncpa [#allocation4], 0
    // Predicated region
    $region2: #{tpu_custom_call.1} parent=1 // pred_check
      _
    $region3: #{tpu_custom_call.1} parent=1 // pred_check_branch
      %12 = sbr.rel (0) target = $region5
    $region4: #{tpu_custom_call.1} parent=1 // pred_region
      %14 = vsyncadd [#allocation3], 0
      %s16 = sshll.u32 %s0, 4
      %s17 = int_to_ptr.hbm [resolvable:$true] %s16
      %s18 = sshll.u32 [#allocation2], 4
      %s19 = int_to_ptr.vmem [resolvable:$true] %s18
      %21 = dma.hbm_to_vmem [thread:$0]  %s17, 128, %s19, [#allocation3]
    $region5: #{tpu_custom_call.1} parent=1 // pred_fallthru
      _
    // Predicated region
    $region6: #{tpu_custom_call.1} parent=1 // pred_check
      _
    $region7: #{tpu_custom_call.1} parent=1 // pred_check_branch
      %23 = sbr.rel (0) target = $region9
    $region8: #{tpu_custom_call.1} parent=1 // pred_region
      %25 = vsyncadd [#allocation6], 0
      %s26 = sshll.u32 %s1, 4
      %s27 = int_to_ptr.hbm [resolvable:$true] %s26
      %s28 = sshll.u32 [#allocation5], 4
      %s29 = int_to_ptr.vmem [resolvable:$true] %s28
      %34 = dma.hbm_to_vmem [thread:$0]  %s27, 256, %s29, [#allocation6], 128, 128, 8
    $region9: #{tpu_custom_call.1} parent=1 // pred_fallthru
      _
    // Predicated region
    $region10: #{tpu_custom_call.1} parent=1 // pred_check
      _
    $region11: #{tpu_custom_call.1} parent=1 // pred_check_branch
      %36 = sbr.rel (0) target = $region13
    $region12: #{tpu_custom_call.1} parent=1 // pred_region
      _
    $region13: #{tpu_custom_call.1} parent=1 // pred_fallthru
      _
    // Predicated region
    $region14: #{tpu_custom_call.1} parent=1 // pred_check
      _
    $region15: #{tpu_custom_call.1} parent=1 // pred_check_branch
      %38 = sbr.rel (0) target = $region17
    $region16: #{tpu_custom_call.1} parent=1 // pred_region
      %40 = dma.done [#allocation3], 128
    $region17: #{tpu_custom_call.1} parent=1 // pred_fallthru
      _
    // Predicated region
    $region18: #{tpu_custom_call.1} parent=1 // pred_check
      _
    $region19: #{tpu_custom_call.1} parent=1 // pred_check_branch
      %42 = sbr.rel (0) target = $region21
    $region20: #{tpu_custom_call.1} parent=1 // pred_region
      %44 = dma.done [#allocation6], 256
    $region21: #{tpu_custom_call.1} parent=1 // pred_fallthru
      _
    %p45 = scmp.eq.s32.totalorder 0, 0
    // Predicated region
    $region22: #{tpu_custom_call.1} parent=1 // pred_check
      %p46 = pneg %p45
    $region23: #{tpu_custom_call.1} parent=1 // pred_check_branch
      %48 = sbr.rel (%p46) target = $region25
    $region24: #{tpu_custom_call.1} parent=1 // pred_region
      %v49 = vld [vmem:[%s2] sm:$0x1]
      %v51 = vperm.slane %v49, 0
      %vm53 = vcmask 130048
      %54 = vst.msk [vmem:[#allocation7] sm:$0xff] %vm53, %v51
    $region25: #{tpu_custom_call.1} parent=1 // pred_fallthru
      _
    %v55 = vld [vmem:[#allocation7] sm:$0xff]
    %v56 = vld [vmem:[#allocation2] sm:$0xff]
    %v57 = vld [vmem:[#allocation5] sm:$0xff]
    %v58 = vld [vmem:[#allocation5 + $0x8] sm:$0xff]
    %vm59 = vcmask 261120
    %v61 = vsel %vm59, %v56, 0
    %v64 = vsel %vm59, %v57, 0
    %v67 = vsel %vm59, %v58, 0
    %69 = vmatpush.xpose.msra.mxu0 0.0
    %70 = vmatpush.xpose.msra.mxu0 0.0
    %71 = vmatpush.xpose.msra.mxu0 0.0
    %72 = vmatpush.xpose.msra.mxu0 0.0
    %73 = vmatpush.xpose.msra.mxu0 0.0
    %74 = vmatpush.xpose.msra.mxu0 0.0
    %75 = vmatpush.xpose.msra.mxu0 0.0
    %76 = vmatpush.xpose.msra.mxu0 0.0
    %77 = vmatpush.xpose.msra.mxu0 0.0
    %78 = vmatpush.xpose.msra.mxu0 0.0
    %79 = vmatpush.xpose.msra.mxu0 0.0
    %80 = vmatpush.xpose.msra.mxu0 0.0
    %81 = vmatpush.xpose.msra.mxu0 0.0
    %82 = vmatpush.xpose.msra.mxu0 0.0
    %83 = vmatpush.xpose.msra.mxu0 %v67
    %84 = vmatpush.xpose.msra.mxu0 %v64
    %85 = vmatmul.f32.gmra.mxu0 %v61
    %v86 = vpop.f32.mrf.mxu0
    %v87 = vadd.f32 0.0, %v86
    %88 = vdwg.mxu0
    %v89 = vadd.f32 %v55, %v87
    %vm90 = vcmask 130048
    %91 = vst.msk [vmem:[#allocation7] sm:$0xff] %vm90, %v89
    // Predicated region
    $region26: #{tpu_custom_call.1} parent=1 // pred_check
      _
    $region27: #{tpu_custom_call.1} parent=1 // pred_check_branch
      %93 = sbr.rel (0) target = $region29
    $region28: #{tpu_custom_call.1} parent=1 // pred_region
      %95 = vsyncadd [#allocation4], 0
      %s97 = sshll.u32 [#allocation7], 4
      %s98 = int_to_ptr.vmem [resolvable:$true] %s97
      %s99 = sshll.u32 %s3, 4
      %s100 = int_to_ptr.hbm [resolvable:$true] %s99
      %102 = dma.vmem_to_hbm [thread:$0]  %s98, 128, %s100, [#allocation4]
    $region29: #{tpu_custom_call.1} parent=1 // pred_fallthru
      _
    // Predicated region
    $region30: #{tpu_custom_call.1} parent=1 // pred_check
      _
    $region31: #{tpu_custom_call.1} parent=1 // pred_check_branch
      %104 = sbr.rel (0) target = $region33
    $region32: #{tpu_custom_call.1} parent=1 // pred_region
      %106 = dma.done [#allocation4], 128
    $region33: #{tpu_custom_call.1} parent=1 // pred_fallthru
      _
    %107 = vsyncpa [#allocation3], 1
    %108 = vsyncpa [#allocation6], 1
    %109 = vsyncpa [#allocation4], 1

</llo_original>
